<compile_context>
chip_gen: v5e
topology: v5e:2x2
jax: 0.10.0
libtpu: 0.0.40
codegen_flags: <defaults>
</compile_context>

<pallas_src>
import functools

import jax
import jax.numpy as jnp
from jax.experimental import pallas as pl
from jax.experimental.pallas import tpu as pltpu

LANE = 128      # vreg lane width (last dim)
SUBLANE = 8     # f32 sublane tile (second-to-last dim)


def _round_up(x: int, m: int) -> int:
    return (x + m - 1) // m * m


def actor_kernel(x_ref, w1_ref, b1_ref, w2_ref, b2_ref, w3_ref, b3_ref, out_ref):
    # Cast activations to the MXU operand dtype in-kernel (free VPU slot).
    x = x_ref[...].astype(w1_ref.dtype)
    # Layer 1: Linear + Tanh (bf16/f32 MXU operands, f32 accumulate/elementwise)
    h1 = jnp.dot(x, w1_ref[...], preferred_element_type=jnp.float32)
    h1 = jnp.tanh(h1 + b1_ref[...]).astype(w2_ref.dtype)
    # Layer 2: Linear + Tanh
    h2 = jnp.dot(h1, w2_ref[...], preferred_element_type=jnp.float32)
    h2 = jnp.tanh(h2 + b2_ref[...]).astype(w3_ref.dtype)
    # Layer 3: Linear (Identity activation)
    logits = jnp.dot(h2, w3_ref[...], preferred_element_type=jnp.float32) + b3_ref[...]
    out_ref[...] = logits.astype(out_ref.dtype)


def prepare_actor_params(params, compute_dtype=jnp.bfloat16):
    """One-time (per param update) pad + cast of weights/biases.

    Only the hidden dim is padded (to a multiple of 128 lanes) so in-kernel
    intermediates are lane-dense; obs and num_actions dims stay unpadded so
    HBM input/output traffic is exactly the real payload. Padding is exact:
    padded obs rows never exist (obs unpadded), padded hidden columns get
    tanh(0 + 0) = 0 and feed zero rows of the next weight.
    """
    obs_size, hidden = params["w1"].shape
    n_acts = params["w3"].shape[1]
    hid_p = _round_up(hidden, LANE)

    def pad(a, rows, cols, dtype):
        a = jnp.asarray(a, dtype)
        return jnp.pad(a, ((0, rows - a.shape[0]), (0, cols - a.shape[1])))

    return {
        "w1": pad(params["w1"], obs_size, hid_p, compute_dtype),
        "b1": pad(params["b1"], 1, hid_p, jnp.float32),
        "w2": pad(params["w2"], hid_p, hid_p, compute_dtype),
        "b2": pad(params["b2"], 1, hid_p, jnp.float32),
        "w3": pad(params["w3"], hid_p, n_acts, compute_dtype),
        "b3": pad(params["b3"], 1, n_acts, jnp.float32),
    }


@functools.partial(jax.jit, static_argnames=("batch_block",))
def actor_forward(ob, prepared, *, batch_block=256):
    """ob: (batch, obs_size) f32; prepared: output of prepare_actor_params."""
    batch, obs_size = ob.shape
    hid_p = prepared["w1"].shape[1]
    n_acts = prepared["w3"].shape[1]

    # Batch block: at least 2 grid steps when the batch is large enough, so the
    # "parallel" grid axis can shard across v7x's two TensorCores.
    blk_b = max(SUBLANE, min(batch_block, _round_up(pl.cdiv(batch, 2), SUBLANE)))
    grid = (pl.cdiv(batch, blk_b),)   # ragged last block is masked by Pallas

    # Weights/biases: constant block index across the batch grid -> DMA'd once,
    # VMEM-resident for the whole kernel.
    const = lambda shape: pl.BlockSpec(shape, lambda i: (0, 0))

    return pl.pallas_call(
        actor_kernel,
        out_shape=jax.ShapeDtypeStruct((batch, n_acts), jnp.float32),
        grid=grid,
        in_specs=[
            pl.BlockSpec((blk_b, obs_size), lambda i: (i, 0)),  # activations
            const((obs_size, hid_p)),
            const((1, hid_p)),
            const((hid_p, hid_p)),
            const((1, hid_p)),
            const((hid_p, n_acts)),
            const((1, n_acts)),
        ],
        out_specs=pl.BlockSpec((blk_b, n_acts), lambda i: (i, 0)),
        compiler_params=pltpu.CompilerParams(
            dimension_semantics=("parallel",),   # batch blocks are independent
        ),
    )(ob, prepared["w1"], prepared["b1"], prepared["w2"], prepared["b2"],
      prepared["w3"], prepared["b3"])


def init_actor_params(key, obs_size, hidden, n_acts):
    """Parameters matching nn.Linear layers, stored transposed as (in, out)."""
    ks = jax.random.split(key, 6)

    def lin(kw, kb, fan_in, fan_out):
        # mimic PyTorch's uniform(-1/sqrt(fan_in), 1/sqrt(fan_in)) init
        bound = 1.0 / jnp.sqrt(jnp.float32(fan_in))
        w = jax.random.uniform(kw, (fan_in, fan_out), jnp.float32, -bound, bound)
        b = jax.random.uniform(kb, (1, fan_out), jnp.float32, -bound, bound)
        return w, b

    w1, b1 = lin(ks[0], ks[1], obs_size, hidden)
    w2, b2 = lin(ks[2], ks[3], hidden, hidden)
    w3, b3 = lin(ks[4], ks[5], hidden, n_acts)
    return {"w1": w1, "b1": b1, "w2": w2, "b2": b2, "w3": w3, "b3": b3}


def actor_reference(ob, params):
    h1 = jnp.tanh(ob @ params["w1"] + params["b1"])
    h2 = jnp.tanh(h1 @ params["w2"] + params["b2"])
    return h2 @ params["w3"] + params["b3"]


if __name__ == "__main__":
    key = jax.random.PRNGKey(0)
    k_param, k_ob, k_ob2 = jax.random.split(key, 3)

    batch = 8
    obs_size = 16      # observation_size
    hidden = 32        # hidden_dim
    n_acts = 4         # num_actions (N_ACTS)

    params = init_actor_params(k_param, obs_size, hidden, n_acts)
    # Pad/cast weights ONCE (per parameter update), not inside every forward.
    prepared_bf16 = prepare_actor_params(params, jnp.bfloat16)
    prepared_f32 = prepare_actor_params(params, jnp.float32)

    ob = jax.random.normal(k_ob, (batch, obs_size), jnp.float32)
    ref = actor_reference(ob, params)

    # Default (performance) path: bf16 MXU operands, f32 accumulate.
    logits_bf16 = actor_forward(ob, prepared_bf16)
    jax.block_until_ready(logits_bf16)
    assert logits_bf16.shape == (batch, n_acts)
    assert jnp.allclose(logits_bf16, ref, atol=5e-2, rtol=5e-2), (
        float(jnp.max(jnp.abs(logits_bf16 - ref))))

    # Full-precision path (same kernel, f32 operands) for a tight check.
    logits_f32 = actor_forward(ob, prepared_f32)
    jax.block_until_ready(logits_f32)
    assert logits_f32.shape == (batch, n_acts)
    assert jnp.allclose(logits_f32, ref, atol=1e-4, rtol=1e-4), (
        float(jnp.max(jnp.abs(logits_f32 - ref))))

    # Larger, non-divisible batch: multi-step parallel grid, VMEM-resident
    # weights, ragged last block handled by Pallas (no wrapper pad/slice).
    big_batch = 200
    ob_big = jax.random.normal(k_ob2, (big_batch, obs_size), jnp.float32)
    ref_big = actor_reference(ob_big, params)
    logits_big = actor_forward(ob_big, prepared_bf16, batch_block=64)
    jax.block_until_ready(logits_big)
    assert logits_big.shape == (big_batch, n_acts)
    assert jnp.allclose(logits_big, ref_big, atol=5e-2, rtol=5e-2), (
        float(jnp.max(jnp.abs(logits_big - ref_big))))

    print("KERNEL_OK")
</pallas_src>

<mosaic_0001>
module attributes {stable_mosaic.version = 11 : i64} {
  func.func @actor_kernel(%arg0: i32, %arg1: memref<8x16xf32, #tpu.memory_space<vmem>>, %arg2: memref<16x128xbf16, #tpu.memory_space<vmem>>, %arg3: memref<1x128xf32, #tpu.memory_space<vmem>>, %arg4: memref<128x128xbf16, #tpu.memory_space<vmem>>, %arg5: memref<1x128xf32, #tpu.memory_space<vmem>>, %arg6: memref<128x4xbf16, #tpu.memory_space<vmem>>, %arg7: memref<1x4xf32, #tpu.memory_space<vmem>>, %arg8: memref<8x4xf32, #tpu.memory_space<vmem>>) attributes {dimension_semantics = [#tpu.dimension_semantics<parallel>], iteration_bounds = array<i64: 1>, scalar_prefetch = 0 : i64, scratch_operands = 0 : i64, tpu.core_type = #tpu.core_type<tc>, window_params = [{transform_indices = @transform_0, window_bounds = array<i64: 8, 16>}, {pipeline_mode = #tpu.pipeline_mode<synchronous>, transform_indices = @transform_1, window_bounds = array<i64: 16, 128>}, {pipeline_mode = #tpu.pipeline_mode<synchronous>, transform_indices = @transform_2, window_bounds = array<i64: 1, 128>}, {pipeline_mode = #tpu.pipeline_mode<synchronous>, transform_indices = @transform_3, window_bounds = array<i64: 128, 128>}, {pipeline_mode = #tpu.pipeline_mode<synchronous>, transform_indices = @transform_4, window_bounds = array<i64: 1, 128>}, {pipeline_mode = #tpu.pipeline_mode<synchronous>, transform_indices = @transform_5, window_bounds = array<i64: 128, 4>}, {pipeline_mode = #tpu.pipeline_mode<synchronous>, transform_indices = @transform_6, window_bounds = array<i64: 1, 4>}, {transform_indices = @transform_7, window_bounds = array<i64: 8, 4>}]} {
    %c0 = arith.constant 0 : index
    %c0_0 = arith.constant 0 : index
    %0 = vector.load %arg1[%c0, %c0_0] : memref<8x16xf32, #tpu.memory_space<vmem>>, vector<8x16xf32>
    %1 = arith.truncf %0 : vector<8x16xf32> to vector<8x16xbf16>
    %c0_1 = arith.constant 0 : index
    %c0_2 = arith.constant 0 : index
    %2 = vector.load %arg2[%c0_1, %c0_2] : memref<16x128xbf16, #tpu.memory_space<vmem>>, vector<16x128xbf16>
    %cst = arith.constant dense<0.000000e+00> : vector<8x128xf32>
    %3 = tpu.matmul %1, %2, %cst {dimension_numbers = #tpu.dot_dimension_numbers<[1], [0], [0], [1], [0, 0, 1, 1], [], []>} : vector<8x16xbf16>, vector<16x128xbf16>, vector<8x128xf32> -> vector<8x128xf32>
    %c0_3 = arith.constant 0 : index
    %c0_4 = arith.constant 0 : index
    %4 = vector.load %arg3[%c0_3, %c0_4] : memref<1x128xf32, #tpu.memory_space<vmem>>, vector<1x128xf32>
    %5 = vector.broadcast %4 : vector<1x128xf32> to vector<8x128xf32>
    %6 = arith.addf %3, %5 : vector<8x128xf32>
    %7 = math.tanh %6 : vector<8x128xf32>
    %8 = arith.truncf %7 : vector<8x128xf32> to vector<8x128xbf16>
    %c0_5 = arith.constant 0 : index
    %c0_6 = arith.constant 0 : index
    %9 = vector.load %arg4[%c0_5, %c0_6] : memref<128x128xbf16, #tpu.memory_space<vmem>>, vector<128x128xbf16>
    %cst_7 = arith.constant dense<0.000000e+00> : vector<8x128xf32>
    %10 = tpu.matmul %8, %9, %cst_7 {dimension_numbers = #tpu.dot_dimension_numbers<[1], [0], [0], [1], [0, 0, 1, 1], [], []>} : vector<8x128xbf16>, vector<128x128xbf16>, vector<8x128xf32> -> vector<8x128xf32>
    %c0_8 = arith.constant 0 : index
    %c0_9 = arith.constant 0 : index
    %11 = vector.load %arg5[%c0_8, %c0_9] : memref<1x128xf32, #tpu.memory_space<vmem>>, vector<1x128xf32>
    %12 = vector.broadcast %11 : vector<1x128xf32> to vector<8x128xf32>
    %13 = arith.addf %10, %12 : vector<8x128xf32>
    %14 = math.tanh %13 : vector<8x128xf32>
    %15 = arith.truncf %14 : vector<8x128xf32> to vector<8x128xbf16>
    %c0_10 = arith.constant 0 : index
    %c0_11 = arith.constant 0 : index
    %16 = vector.load %arg6[%c0_10, %c0_11] : memref<128x4xbf16, #tpu.memory_space<vmem>>, vector<128x4xbf16>
    %cst_12 = arith.constant dense<0.000000e+00> : vector<8x4xf32>
    %17 = tpu.matmul %15, %16, %cst_12 {dimension_numbers = #tpu.dot_dimension_numbers<[1], [0], [0], [1], [0, 0, 1, 1], [], []>} : vector<8x128xbf16>, vector<128x4xbf16>, vector<8x4xf32> -> vector<8x4xf32>
    %c0_13 = arith.constant 0 : index
    %c0_14 = arith.constant 0 : index
    %18 = vector.load %arg7[%c0_13, %c0_14] : memref<1x4xf32, #tpu.memory_space<vmem>>, vector<1x4xf32>
    %19 = vector.broadcast %18 : vector<1x4xf32> to vector<8x4xf32>
    %20 = arith.addf %17, %19 : vector<8x4xf32>
    %c0_15 = arith.constant 0 : index
    %c0_16 = arith.constant 0 : index
    %21 = vector.load %arg8[%c0_15, %c0_16] : memref<8x4xf32, #tpu.memory_space<vmem>>, vector<8x4xf32>
    tpu.vector_store %arg8[%c0_15, %c0_16], %20 {strides = array<i32>} : memref<8x4xf32, #tpu.memory_space<vmem>>, vector<8x4xf32>,
    return
  }
  func.func @transform_0(%arg0: i32) -> (i32, i32) {
    %c0_i32 = arith.constant 0 : i32
    %c0_i32_0 = arith.constant 0 : i32
    return %arg0, %c0_i32 : i32, i32
  }
  func.func @transform_1(%arg0: i32) -> (i32, i32) {
    %c0_i32 = arith.constant 0 : i32
    %c0_i32_0 = arith.constant 0 : i32
    %c0_i32_1 = arith.constant 0 : i32
    return %c0_i32, %c0_i32_0 : i32, i32
  }
  func.func @transform_2(%arg0: i32) -> (i32, i32) {
    %c0_i32 = arith.constant 0 : i32
    %c0_i32_0 = arith.constant 0 : i32
    %c0_i32_1 = arith.constant 0 : i32
    return %c0_i32, %c0_i32_0 : i32, i32
  }
  func.func @transform_3(%arg0: i32) -> (i32, i32) {
    %c0_i32 = arith.constant 0 : i32
    %c0_i32_0 = arith.constant 0 : i32
    %c0_i32_1 = arith.constant 0 : i32
    return %c0_i32, %c0_i32_0 : i32, i32
  }
  func.func @transform_4(%arg0: i32) -> (i32, i32) {
    %c0_i32 = arith.constant 0 : i32
    %c0_i32_0 = arith.constant 0 : i32
    %c0_i32_1 = arith.constant 0 : i32
    return %c0_i32, %c0_i32_0 : i32, i32
  }
  func.func @transform_5(%arg0: i32) -> (i32, i32) {
    %c0_i32 = arith.constant 0 : i32
    %c0_i32_0 = arith.constant 0 : i32
    %c0_i32_1 = arith.constant 0 : i32
    return %c0_i32, %c0_i32_0 : i32, i32
  }
  func.func @transform_6(%arg0: i32) -> (i32, i32) {
    %c0_i32 = arith.constant 0 : i32
    %c0_i32_0 = arith.constant 0 : i32
    %c0_i32_1 = arith.constant 0 : i32
    return %c0_i32, %c0_i32_0 : i32, i32
  }
  func.func @transform_7(%arg0: i32) -> (i32, i32) {
    %c0_i32 = arith.constant 0 : i32
    %c0_i32_0 = arith.constant 0 : i32
    return %arg0, %c0_i32 : i32, i32
  }
}

</mosaic_0001>

<llo_original>
// kernel: actor_forward.1
$region0: #{actor_forward.1}
  #allocation0 [shape = 'u32[]', space=smem, size = 0x4, offset = 0x4, fixed_abs, tag = 'smem constant byte address 0x4 - core index']
  #allocation1 [shape = 'u32[72,128]{1,0:T(1,128)}', space=vmem, size = 0x9000, scoped, tag = 'internal scratch']
  %s0 = inlined_call_operand.hbm [shape: f32[8,16], index: 0, kind: input, shape index: {}]
  %s1 = inlined_call_operand.hbm [shape: bf16[16,128], index: 1, kind: input, shape index: {}]
  %s2 = inlined_call_operand.vmem [shape: f32[1,128], index: 2, kind: input, shape index: {}]
  %s3 = inlined_call_operand.vmem [shape: bf16[128,128], index: 3, kind: input, shape index: {}]
  %s4 = inlined_call_operand.vmem [shape: f32[1,128], index: 4, kind: input, shape index: {}]
  %s5 = inlined_call_operand.vmem [shape: bf16[128,4], index: 5, kind: input, shape index: {}]
  %s6 = inlined_call_operand.vmem [shape: f32[1,4], index: 6, kind: input, shape index: {}]
  %s7 = inlined_call_operand.vmem [shape: f32[8,4], index: 7, kind: output, shape index: {}]
  %s8 = sld [smem:[#allocation0]]
  $region46: #{actor_forward.1} parent=0
    _
  %s10 = ssub.s32 1, %s8
  %s11 = scalar_select 0, %s10, %s8
  $region1: #{actor_forward.1} parent=0
    #allocation2 [shape = 'u8[4096]{0}', space=vmem, size = 0x1000, scoped, tag = 'input window, operand 0, single buffered']
    #allocation3 [shape = 's32[1]{0}', space=sflag, size = 0x4, scoped, tag = 'scoped memory for actor_forward.1']
    #allocation4 [shape = 'u8[4096]{0}', space=vmem, size = 0x1000, scoped, tag = 'input window, operand 1, single buffered']
    #allocation5 [shape = 's32[1]{0}', space=sflag, size = 0x4, scoped, tag = 'scoped memory for actor_forward.1']
    %12 = vsyncpa [#allocation3], 0
    %13 = vsyncpa [#allocation5], 0
    // Predicated region
    $region2: #{actor_forward.1} parent=1 // pred_check
      _
    $region3: #{actor_forward.1} parent=1 // pred_check_branch
      %15 = sbr.rel (0) target = $region5
    $region4: #{actor_forward.1} parent=1 // pred_region
      %17 = vsyncadd [#allocation3], 0
      %s19 = sshll.u32 %s0, 4
      %s20 = int_to_ptr.hbm [resolvable:$true] %s19
      %s21 = sshll.u32 [#allocation2], 4
      %s22 = int_to_ptr.vmem [resolvable:$true] %s21
      %24 = dma.hbm_to_vmem [thread:$0]  %s20, 128, %s22, [#allocation3]
    $region5: #{actor_forward.1} parent=1 // pred_fallthru
      _
    // Predicated region
    $region6: #{actor_forward.1} parent=1 // pred_check
      _
    $region7: #{actor_forward.1} parent=1 // pred_check_branch
      %26 = sbr.rel (0) target = $region9
    $region8: #{actor_forward.1} parent=1 // pred_region
      %28 = vsyncadd [#allocation5], 0
      %s29 = sshll.u32 %s1, 4
      %s30 = int_to_ptr.hbm [resolvable:$true] %s29
      %s31 = sshll.u32 [#allocation4], 4
      %s32 = int_to_ptr.vmem [resolvable:$true] %s31
      %37 = dma.hbm_to_vmem [thread:$0]  %s30, 128, %s32, [#allocation5], 64, 64, 4
    $region9: #{actor_forward.1} parent=1 // pred_fallthru
      _
    // Predicated region
    $region10: #{actor_forward.1} parent=1 // pred_check
      _
    $region11: #{actor_forward.1} parent=1 // pred_check_branch
      %39 = sbr.rel (0) target = $region13
    $region12: #{actor_forward.1} parent=1 // pred_region
      _
    $region13: #{actor_forward.1} parent=1 // pred_fallthru
      _
    // Predicated region
    $region14: #{actor_forward.1} parent=1 // pred_check
      _
    $region15: #{actor_forward.1} parent=1 // pred_check_branch
      %41 = sbr.rel (0) target = $region17
    $region16: #{actor_forward.1} parent=1 // pred_region
      _
    $region17: #{actor_forward.1} parent=1 // pred_fallthru
      _
    // Predicated region
    $region18: #{actor_forward.1} parent=1 // pred_check
      _
    $region19: #{actor_forward.1} parent=1 // pred_check_branch
      %43 = sbr.rel (0) target = $region21
    $region20: #{actor_forward.1} parent=1 // pred_region
      _
    $region21: #{actor_forward.1} parent=1 // pred_fallthru
      _
    // Predicated region
    $region22: #{actor_forward.1} parent=1 // pred_check
      _
    $region23: #{actor_forward.1} parent=1 // pred_check_branch
      %45 = sbr.rel (0) target = $region25
    $region24: #{actor_forward.1} parent=1 // pred_region
      _
    $region25: #{actor_forward.1} parent=1 // pred_fallthru
      _
    // Predicated region
    $region26: #{actor_forward.1} parent=1 // pred_check
      _
    $region27: #{actor_forward.1} parent=1 // pred_check_branch
      %47 = sbr.rel (0) target = $region29
    $region28: #{actor_forward.1} parent=1 // pred_region
      _
    $region29: #{actor_forward.1} parent=1 // pred_fallthru
      _
    // Predicated region
    $region30: #{actor_forward.1} parent=1 // pred_check
      _
    $region31: #{actor_forward.1} parent=1 // pred_check_branch
      %49 = sbr.rel (0) target = $region33
    $region32: #{actor_forward.1} parent=1 // pred_region
      %51 = dma.done [#allocation3], 128
    $region33: #{actor_forward.1} parent=1 // pred_fallthru
      _
    // Predicated region
    $region34: #{actor_forward.1} parent=1 // pred_check
      _
    $region35: #{actor_forward.1} parent=1 // pred_check_branch
      %53 = sbr.rel (0) target = $region37
    $region36: #{actor_forward.1} parent=1 // pred_region
      %55 = dma.done [#allocation5], 128
    $region37: #{actor_forward.1} parent=1 // pred_fallthru
      _
    %v57 = vld [vmem:[#allocation2] sm:$0xff]
    %v58 = vpack.c.bf16 %v57, %v57
    %v59 = vld [vmem:[#allocation4] sm:$0xf]
    %v60 = vld [vmem:[#allocation4 + $0x4] sm:$0xf]
    %v61 = vld [vmem:[%s2] sm:$0x1]
    %v63 = vperm.slane %v61, 0
    %v67 = vunpack.c.l.b16 %v59
    %v68 = vunpack.c.l.b16 %v60
    %v69 = vpack.c.b16 %v68, %v67
    %vm71 = vcmask 130048
    %v73 = vsel %vm71, %v58, 0
    %75 = vmatpush.bf16.msra.mxu0 0
    %76 = vmatpush.bf16.msra.mxu0 0
    %77 = vmatpush.bf16.msra.mxu0 0
    %78 = vmatpush.bf16.msra.mxu0 0
    %79 = vmatpush.bf16.msra.mxu0 0
    %80 = vmatpush.bf16.msra.mxu0 0
    %81 = vmatpush.bf16.msra.mxu0 0
    %82 = vmatpush.bf16.msra.mxu0 %v69
    %83 = vmatmul.bf16.gmra.mxu0 %v73
    %v84 = vpop.f32.mrf.mxu0
    %v85 = vadd.f32 %v63, %v84
    %v86 = vpop.f32.mrf.mxu0
    %87 = vdwg.mxu0
    %v88 = vtanh.pop %v85
    %v89 = vpack.c.bf16 %v88, %v88
    %v90 = vld [vmem:[%s3] sm:$0xf]
    %v91 = vld [vmem:[%s3 + $0x4] sm:$0xf]
    %v92 = vld [vmem:[%s3 + $0x8] sm:$0xf]
    %v93 = vld [vmem:[%s3 + $0xc] sm:$0xf]
    %v94 = vld [vmem:[%s3 + $0x10] sm:$0xf]
    %v95 = vld [vmem:[%s3 + $0x14] sm:$0xf]
    %v96 = vld [vmem:[%s3 + $0x18] sm:$0xf]
    %v97 = vld [vmem:[%s3 + $0x1c] sm:$0xf]
    %v98 = vld [vmem:[%s3 + $0x20] sm:$0xf]
    %v99 = vld [vmem:[%s3 + $0x24] sm:$0xf]
    %v100 = vld [vmem:[%s3 + $0x28] sm:$0xf]
    %v101 = vld [vmem:[%s3 + $0x2c] sm:$0xf]
    %v102 = vld [vmem:[%s3 + $0x30] sm:$0xf]
    %v103 = vld [vmem:[%s3 + $0x34] sm:$0xf]
    %v104 = vld [vmem:[%s3 + $0x38] sm:$0xf]
    %v105 = vld [vmem:[%s3 + $0x3c] sm:$0xf]
    %v106 = vld [vmem:[%s4] sm:$0x1]
    %v108 = vperm.slane %v106, 0
    %v126 = vunpack.c.l.b16 %v90
    %v127 = vunpack.c.l.b16 %v91
    %v128 = vunpack.c.l.b16 %v92
    %v129 = vunpack.c.l.b16 %v93
    %v130 = vunpack.c.l.b16 %v94
    %v131 = vunpack.c.l.b16 %v95
    %v132 = vunpack.c.l.b16 %v96
    %v133 = vunpack.c.l.b16 %v97
    %v134 = vunpack.c.l.b16 %v98
    %v135 = vunpack.c.l.b16 %v99
    %v136 = vunpack.c.l.b16 %v100
    %v137 = vunpack.c.l.b16 %v101
    %v138 = vunpack.c.l.b16 %v102
    %v139 = vunpack.c.l.b16 %v103
    %v140 = vunpack.c.l.b16 %v104
    %v141 = vunpack.c.l.b16 %v105
    %v142 = vpack.c.b16 %v127, %v126
    %v143 = vpack.c.b16 %v129, %v128
    %v144 = vpack.c.b16 %v131, %v130
    %v145 = vpack.c.b16 %v133, %v132
    %v146 = vpack.c.b16 %v135, %v134
    %v147 = vpack.c.b16 %v137, %v136
    %v148 = vpack.c.b16 %v139, %v138
    %v149 = vpack.c.b16 %v141, %v140
    %158 = vmatpush.bf16.msra.mxu0 %v149
    %159 = vmatpush.bf16.msra.mxu0 %v148
    %160 = vmatpush.bf16.msra.mxu0 %v147
    %161 = vmatpush.bf16.msra.mxu0 %v146
    %162 = vmatpush.bf16.msra.mxu0 %v145
    %163 = vmatpush.bf16.msra.mxu0 %v144
    %164 = vmatpush.bf16.msra.mxu0 %v143
    %165 = vmatpush.bf16.msra.mxu0 %v142
    %166 = vmatmul.bf16.gmra.mxu0 %v89
    %v167 = vpop.f32.mrf.mxu0
    %v168 = vadd.f32 %v108, %v167
    %v169 = vpop.f32.mrf.mxu0
    %170 = vdwg.mxu0
    %v171 = vtanh.pop %v168
    %v172 = vpack.c.bf16 %v171, %v171
    %v173 = vld [vmem:[%s5] sm:$0xf]
    %v174 = vld [vmem:[%s5 + $0x4] sm:$0xf]
    %v175 = vld [vmem:[%s5 + $0x8] sm:$0xf]
    %v176 = vld [vmem:[%s5 + $0xc] sm:$0xf]
    %v177 = vld [vmem:[%s5 + $0x10] sm:$0xf]
    %v178 = vld [vmem:[%s5 + $0x14] sm:$0xf]
    %v179 = vld [vmem:[%s5 + $0x18] sm:$0xf]
    %v180 = vld [vmem:[%s5 + $0x1c] sm:$0xf]
    %v181 = vld [vmem:[%s5 + $0x20] sm:$0xf]
    %v182 = vld [vmem:[%s5 + $0x24] sm:$0xf]
    %v183 = vld [vmem:[%s5 + $0x28] sm:$0xf]
    %v184 = vld [vmem:[%s5 + $0x2c] sm:$0xf]
    %v185 = vld [vmem:[%s5 + $0x30] sm:$0xf]
    %v186 = vld [vmem:[%s5 + $0x34] sm:$0xf]
    %v187 = vld [vmem:[%s5 + $0x38] sm:$0xf]
    %v188 = vld [vmem:[%s5 + $0x3c] sm:$0xf]
    %v189 = vld [vmem:[%s6] sm:$0x1]
    %v191 = vperm.slane %v189, 0
    %v209 = vunpack.c.l.b16 %v173
    %v210 = vunpack.c.l.b16 %v174
    %v211 = vunpack.c.l.b16 %v175
    %v212 = vunpack.c.l.b16 %v176
    %v213 = vunpack.c.l.b16 %v177
    %v214 = vunpack.c.l.b16 %v178
    %v215 = vunpack.c.l.b16 %v179
    %v216 = vunpack.c.l.b16 %v180
    %v217 = vunpack.c.l.b16 %v181
    %v218 = vunpack.c.l.b16 %v182
    %v219 = vunpack.c.l.b16 %v183
    %v220 = vunpack.c.l.b16 %v184
    %v221 = vunpack.c.l.b16 %v185
    %v222 = vunpack.c.l.b16 %v186
    %v223 = vunpack.c.l.b16 %v187
    %v224 = vunpack.c.l.b16 %v188
    %v225 = vpack.c.b16 %v210, %v209
    %v226 = vpack.c.b16 %v212, %v211
    %v227 = vpack.c.b16 %v214, %v213
    %v228 = vpack.c.b16 %v216, %v215
    %v229 = vpack.c.b16 %v218, %v217
    %v230 = vpack.c.b16 %v220, %v219
    %v231 = vpack.c.b16 %v222, %v221
    %v232 = vpack.c.b16 %v224, %v223
    %241 = vmatpush.bf16.msra.mxu0 %v232
    %242 = vmatpush.bf16.msra.mxu0 %v231
    %243 = vmatpush.bf16.msra.mxu0 %v230
    %244 = vmatpush.bf16.msra.mxu0 %v229
    %245 = vmatpush.bf16.msra.mxu0 %v228
    %246 = vmatpush.bf16.msra.mxu0 %v227
    %247 = vmatpush.bf16.msra.mxu0 %v226
    %248 = vmatpush.bf16.msra.mxu0 %v225
    %249 = vmatmul.bf16.gmra.mxu0 %v172
    %v250 = vpop.f32.mrf.mxu0
    %v251 = vadd.f32 %v191, %v250
    %v252 = vpop.f32.mrf.mxu0
    %253 = vdwg.mxu0
    %vm254 = vcmask 31744
    %255 = vst.msk [vmem:[%s7] sm:$0xff] %vm254, %v251
    // Predicated region
    $region38: #{actor_forward.1} parent=1 // pred_check
      _
    $region39: #{actor_forward.1} parent=1 // pred_check_branch
      %257 = sbr.rel (0) target = $region41
    $region40: #{actor_forward.1} parent=1 // pred_region
      _
    $region41: #{actor_forward.1} parent=1 // pred_fallthru
      _
    // Predicated region
    $region42: #{actor_forward.1} parent=1 // pred_check
      _
    $region43: #{actor_forward.1} parent=1 // pred_check_branch
      %259 = sbr.rel (0) target = $region45
    $region44: #{actor_forward.1} parent=1 // pred_region
      _
    $region45: #{actor_forward.1} parent=1 // pred_fallthru
      _
    %260 = vsyncpa [#allocation3], 1
    %261 = vsyncpa [#allocation5], 1

</llo_original>
